<compile_context>
chip_gen: v7x
topology: tpu7x:2x2x1
jax: 0.10.0
libtpu: 0.0.40
codegen_flags: <defaults>
</compile_context>

<pallas_src>
import functools

import jax
import jax.numpy as jnp
from jax.experimental import pallas as pl
from jax.experimental.pallas import tpu as pltpu

_LANE = 128


def _leaky_relu(x, slope=0.1):
    return jnp.where(x >= 0, x, slope * x)


def _channel_attention_kernel(x_ref, w_in_ref, b_in_ref,
                              w_mid_ref, b_mid_ref,
                              w_out_ref, b_out_ref,
                              o_ref, acc_ref, *, inv_hw, hw_rem):
    s = pl.program_id(1)
    last = pl.num_programs(1) - 1

    @pl.when(s == 0)
    def _():
        acc_ref[...] = jnp.zeros_like(acc_ref)

    # Streaming partial sum over this spatial tile (the HBM-bound part).
    x_tile = x_ref[...].astype(jnp.float32)              # (tn, C, t_hw)

    if hw_rem:
        # Ragged final tile: Pallas does NOT zero the out-of-bounds lanes of a
        # partial block, so mask them.  Only the last step pays for the mask.
        @pl.when(s != last)
        def _():
            acc_ref[...] += jnp.sum(x_tile, axis=-1)

        @pl.when(s == last)
        def _():
            lane = jax.lax.broadcasted_iota(jnp.int32, x_tile.shape, 2)
            acc_ref[...] += jnp.sum(
                jnp.where(lane < hw_rem, x_tile, 0.0), axis=-1)
    else:
        acc_ref[...] += jnp.sum(x_tile, axis=-1)

    @pl.when(s == last)
    def _():
        # AdaptiveAvgPool2d(1): exact sum-then-scale by compile-time 1/(H*W).
        pooled = acc_ref[...] * inv_hw                    # (tn, C)

        # conv_in (1x1, C -> C) + LeakyReLU(0.1)
        h = jnp.dot(pooled, w_in_ref[...],
                    preferred_element_type=jnp.float32) + b_in_ref[...]
        h = _leaky_relu(h)
        # conv_mid (1x1, C -> C//r) + LeakyReLU(0.1)
        h = jnp.dot(h, w_mid_ref[...],
                    preferred_element_type=jnp.float32) + b_mid_ref[...]
        h = _leaky_relu(h)
        # conv_out (1x1, C//r -> C) + sigmoid
        h = jnp.dot(h, w_out_ref[...],
                    preferred_element_type=jnp.float32) + b_out_ref[...]
        o_ref[:, 0, :] = jax.nn.sigmoid(h).astype(o_ref.dtype)


def _target_block_bytes():
    """~4 MiB per streamed x buffer; a bit larger on v7x (3.2 TB/s HBM)."""
    try:
        info = pltpu.get_tpu_info()
        if info.vmem_capacity_bytes <= (64 << 20):        # v7x-class TensorCore
            return 6 << 20
    except Exception:
        pass
    return 4 << 20


def _pick_tiling(N, C, HW, itemsize, target):
    per_sample = C * HW * itemsize
    if per_sample <= target:
        # Small feature map: full spatial extent per sample, batch samples.
        t_hw = HW
        tn = max(1, min(N, target // max(per_sample, 1)))
        while N % tn:            # avoid ragged batch blocks
            tn -= 1
    else:
        tn = 1
        lanes = max(_LANE, (target // (C * itemsize)) // _LANE * _LANE)
        t_hw = min(lanes, pl.cdiv(HW, _LANE) * _LANE)
        if t_hw >= HW:
            t_hw = HW            # full dim is always a legal block size
        elif HW % t_hw:
            # Prefer a lane-aligned tile that divides HW (no masked tail, no
            # wasted tail DMA) as long as it keeps >= half the byte budget.
            cand = t_hw
            while cand >= max(_LANE, t_hw // 2):
                if HW % cand == 0:
                    t_hw = cand
                    break
                cand -= _LANE
    return tn, t_hw


def channel_attention(x_nchw, params, *, t_hw=None, tn=None):
    """x_nchw: (N, C, H, W). Returns (N, C, 1, 1) float32 channel gates."""
    N, C, H, W = x_nchw.shape
    HW = H * W
    w_in, b_in, w_mid, b_mid, w_out, b_out = params
    Cm = w_mid.shape[1]          # reduced channels

    itemsize = jnp.dtype(x_nchw.dtype).itemsize
    target = _target_block_bytes()
    auto_tn, auto_t_hw = _pick_tiling(N, C, HW, itemsize, target)
    tn = auto_tn if tn is None else tn
    t_hw = auto_t_hw if t_hw is None else t_hw

    num_b = pl.cdiv(N, tn)
    num_s = pl.cdiv(HW, t_hw)
    hw_rem = HW % t_hw           # != 0 -> last spatial tile is masked in-kernel

    x_flat = x_nchw.reshape(N, C, HW)     # metadata reshape, lane-dense HW

    weights_bytes = 4 * (C * C + C + C * Cm + Cm + Cm * C + C)
    single_buf_weights = weights_bytes >= (1 << 20)

    def _const_spec(shape):
        idx = lambda b, s: (0, 0)
        if single_buf_weights:
            try:
                # Constant index_map -> resident; no need to double-buffer.
                return pl.BlockSpec(shape, idx, pipeline_mode=pl.Buffered(1))
            except TypeError:     # BlockSpec without pipeline_mode support
                pass
        return pl.BlockSpec(shape, idx)

    # VMEM: double-buffered x stream + resident weights + out/acc + headroom.
    x_stream_bytes = 2 * tn * C * t_hw * itemsize
    w_buf_bytes = (1 if single_buf_weights else 2) * weights_bytes
    misc_bytes = 3 * tn * C * 4
    vmem_limit = int(min(max(x_stream_bytes + w_buf_bytes + misc_bytes
                             + (8 << 20), 32 << 20), 48 << 20))

    kernel = functools.partial(_channel_attention_kernel,
                               inv_hw=1.0 / float(HW), hw_rem=hw_rem)

    out = pl.pallas_call(
        kernel,
        out_shape=jax.ShapeDtypeStruct((N, 1, C), jnp.float32),
        grid_spec=pltpu.PrefetchScalarGridSpec(
            num_scalar_prefetch=0,
            grid=(num_b, num_s),
            in_specs=[
                # Streamed activation tiles (tn samples x C x t_hw lanes).
                pl.BlockSpec((tn, C, t_hw), lambda b, s: (b, 0, s)),
                # Weights/biases: constant index_maps -> fetched once, resident.
                _const_spec((C, C)),    # w_in  (C_in, C_out)
                _const_spec((1, C)),    # b_in
                _const_spec((C, Cm)),   # w_mid
                _const_spec((1, Cm)),   # b_mid
                _const_spec((Cm, C)),   # w_out
                _const_spec((1, C)),    # b_out
            ],
            out_specs=pl.BlockSpec((tn, 1, C), lambda b, s: (b, 0, 0)),
            scratch_shapes=[pltpu.VMEM((tn, C), jnp.float32)],  # f32 pooled sum
        ),
        compiler_params=pltpu.CompilerParams(
            dimension_semantics=("parallel", "arbitrary"),
            vmem_limit_bytes=vmem_limit,
        ),
    )(x_flat, w_in, b_in, w_mid, b_mid, w_out, b_out)

    return out.reshape(N, C, 1, 1)


def init_params(key, in_channels, reduction_ratio=2):
    """Deterministic init. Weights stored pre-transposed: (C_in, C_out)."""
    C = in_channels
    Cm = C // reduction_ratio
    k = jax.random.split(key, 6)
    w_in = 0.1 * jax.random.normal(k[0], (C, C), jnp.float32)     # conv_in.weight.T
    b_in = 0.1 * jax.random.normal(k[1], (1, C), jnp.float32)
    w_mid = 0.1 * jax.random.normal(k[2], (C, Cm), jnp.float32)   # conv_mid.weight.T
    b_mid = 0.1 * jax.random.normal(k[3], (1, Cm), jnp.float32)
    w_out = 0.1 * jax.random.normal(k[4], (Cm, C), jnp.float32)   # conv_out.weight.T
    b_out = 0.1 * jax.random.normal(k[5], (1, C), jnp.float32)
    return (w_in, b_in, w_mid, b_mid, w_out, b_out)


def channel_attention_ref(x_nchw, params):
    """Pure-JAX reference matching the PyTorch forward."""
    w_in, b_in, w_mid, b_mid, w_out, b_out = params
    pooled = jnp.mean(x_nchw.astype(jnp.float32), axis=(2, 3))    # (N, C)
    h = _leaky_relu(pooled @ w_in + b_in)
    h = _leaky_relu(h @ w_mid + b_mid)
    h = jax.nn.sigmoid(h @ w_out + b_out)
    return h[:, :, None, None]


if __name__ == "__main__":
    key = jax.random.PRNGKey(0)
    kx1, kx2, kp1, kp2 = jax.random.split(key, 4)

    # Case 1: module-sized input, auto tiling (single batched block, full HW).
    N, C, H, W = 2, 4, 16, 16
    x1 = jax.random.normal(kx1, (N, C, H, W), jnp.float32)
    p1 = init_params(kp1, in_channels=C, reduction_ratio=2)
    out1 = jax.block_until_ready(channel_attention(x1, p1))
    ref1 = channel_attention_ref(x1, p1)
    assert out1.shape == (N, C, 1, 1), out1.shape
    assert jnp.allclose(out1, ref1, atol=2e-5, rtol=2e-5), (
        f"case1 max abs err {jnp.max(jnp.abs(out1 - ref1))}")

    # Case 2: same input, forced multi-step spatial accumulation (grid (2, 2)).
    out2 = jax.block_until_ready(channel_attention(x1, p1, t_hw=128, tn=1))
    assert jnp.allclose(out2, ref1, atol=2e-5, rtol=2e-5), (
        f"case2 max abs err {jnp.max(jnp.abs(out2 - ref1))}")

    # Case 3: ragged final spatial tile (HW=384, t_hw=256 -> in-kernel mask).
    N3, C3, H3, W3 = 2, 8, 16, 24
    x3 = jax.random.normal(kx2, (N3, C3, H3, W3), jnp.float32)
    p3 = init_params(kp2, in_channels=C3, reduction_ratio=2)
    out3 = jax.block_until_ready(channel_attention(x3, p3, t_hw=256, tn=1))
    ref3 = channel_attention_ref(x3, p3)
    assert out3.shape == (N3, C3, 1, 1), out3.shape
    assert jnp.allclose(out3, ref3, atol=2e-5, rtol=2e-5), (
        f"case3 max abs err {jnp.max(jnp.abs(out3 - ref3))}")

    print("KERNEL_OK")
</pallas_src>

<mosaic_0001>
module attributes {stable_mosaic.version = 11 : i64} {
  func.func @_channel_attention_kernel(%arg0: i32, %arg1: i32, %arg2: memref<2x4x256xf32, #tpu.memory_space<vmem>>, %arg3: memref<4x4xf32, #tpu.memory_space<vmem>>, %arg4: memref<1x4xf32, #tpu.memory_space<vmem>>, %arg5: memref<4x2xf32, #tpu.memory_space<vmem>>, %arg6: memref<1x2xf32, #tpu.memory_space<vmem>>, %arg7: memref<2x4xf32, #tpu.memory_space<vmem>>, %arg8: memref<1x4xf32, #tpu.memory_space<vmem>>, %arg9: memref<2x1x4xf32, #tpu.memory_space<vmem>>, %arg10: memref<2x4xf32, #tpu.memory_space<vmem>>) attributes {dimension_semantics = [#tpu.dimension_semantics<parallel>, #tpu.dimension_semantics<arbitrary>], iteration_bounds = array<i64: 1, 1>, scalar_prefetch = 0 : i64, scratch_operands = 1 : i64, tpu.core_type = #tpu.core_type<tc>, window_params = [{transform_indices = @transform_0, window_bounds = array<i64: 2, 4, 256>}, {pipeline_mode = #tpu.pipeline_mode<synchronous>, transform_indices = @transform_1, window_bounds = array<i64: 4, 4>}, {pipeline_mode = #tpu.pipeline_mode<synchronous>, transform_indices = @transform_2, window_bounds = array<i64: 1, 4>}, {pipeline_mode = #tpu.pipeline_mode<synchronous>, transform_indices = @transform_3, window_bounds = array<i64: 4, 2>}, {pipeline_mode = #tpu.pipeline_mode<synchronous>, transform_indices = @transform_4, window_bounds = array<i64: 1, 2>}, {pipeline_mode = #tpu.pipeline_mode<synchronous>, transform_indices = @transform_5, window_bounds = array<i64: 2, 4>}, {pipeline_mode = #tpu.pipeline_mode<synchronous>, transform_indices = @transform_6, window_bounds = array<i64: 1, 4>}, {transform_indices = @transform_7, window_bounds = array<i64: 2, 1, 4>}]} {
    %c0_i32 = arith.constant 0 : i32
    %0 = arith.cmpi eq, %arg1, %c0_i32 : i32
    %1 = arith.extui %0 : i1 to i32
    %c0_i32_0 = arith.constant 0 : i32
    %2 = arith.cmpi ne, %1, %c0_i32_0 : i32
    scf.if %2 {
      %cst_9 = arith.constant 0.000000e+00 : f32
      %11 = vector.broadcast %cst_9 : f32 to vector<2x4xf32>
      %c0_10 = arith.constant 0 : index
      %c0_11 = arith.constant 0 : index
      %12 = vector.load %arg10[%c0_10, %c0_11] : memref<2x4xf32, #tpu.memory_space<vmem>>, vector<2x4xf32>
      tpu.vector_store %arg10[%c0_10, %c0_11], %11 {strides = array<i32>} : memref<2x4xf32, #tpu.memory_space<vmem>>, vector<2x4xf32>,
    } else {
    }
    %c0 = arith.constant 0 : index
    %c0_1 = arith.constant 0 : index
    %c0_2 = arith.constant 0 : index
    %3 = vector.load %arg2[%c0, %c0_1, %c0_2] : memref<2x4x256xf32, #tpu.memory_space<vmem>>, vector<2x4x256xf32>
    %c0_3 = arith.constant 0 : index
    %c0_4 = arith.constant 0 : index
    %4 = vector.load %arg10[%c0_3, %c0_4] : memref<2x4xf32, #tpu.memory_space<vmem>>, vector<2x4xf32>
    %cst = arith.constant dense<0.000000e+00> : vector<2x4xf32>
    %5 = vector.multi_reduction <add>, %3, %cst [2] : vector<2x4x256xf32> to vector<2x4xf32>
    %6 = arith.addf %4, %5 : vector<2x4xf32>
    %c0_5 = arith.constant 0 : index
    %c0_6 = arith.constant 0 : index
    %7 = vector.load %arg10[%c0_5, %c0_6] : memref<2x4xf32, #tpu.memory_space<vmem>>, vector<2x4xf32>
    tpu.vector_store %arg10[%c0_5, %c0_6], %6 {strides = array<i32>} : memref<2x4xf32, #tpu.memory_space<vmem>>, vector<2x4xf32>,
    %c0_i32_7 = arith.constant 0 : i32
    %8 = arith.cmpi eq, %arg1, %c0_i32_7 : i32
    %9 = arith.extui %8 : i1 to i32
    %c0_i32_8 = arith.constant 0 : i32
    %10 = arith.cmpi ne, %9, %c0_i32_8 : i32
    scf.if %10 {
      %c0_9 = arith.constant 0 : index
      %c0_10 = arith.constant 0 : index
      %11 = vector.load %arg10[%c0_9, %c0_10] : memref<2x4xf32, #tpu.memory_space<vmem>>, vector<2x4xf32>
      %cst_11 = arith.constant 3.906250e-03 : f32
      %12 = vector.broadcast %cst_11 : f32 to vector<2x4xf32>
      %13 = arith.mulf %11, %12 : vector<2x4xf32>
      %c0_12 = arith.constant 0 : index
      %c0_13 = arith.constant 0 : index
      %14 = vector.load %arg3[%c0_12, %c0_13] : memref<4x4xf32, #tpu.memory_space<vmem>>, vector<4x4xf32>
      %cst_14 = arith.constant dense<0.000000e+00> : vector<2x4xf32>
      %15 = tpu.matmul %13, %14, %cst_14 {dimension_numbers = #tpu.dot_dimension_numbers<[1], [0], [0], [1], [0, 0, 1, 1], [], []>} : vector<2x4xf32>, vector<4x4xf32>, vector<2x4xf32> -> vector<2x4xf32>
      %c0_15 = arith.constant 0 : index
      %c0_16 = arith.constant 0 : index
      %16 = vector.load %arg4[%c0_15, %c0_16] : memref<1x4xf32, #tpu.memory_space<vmem>>, vector<1x4xf32>
      %17 = vector.broadcast %16 : vector<1x4xf32> to vector<2x4xf32>
      %18 = arith.addf %15, %17 : vector<2x4xf32>
      %cst_17 = arith.constant 0.000000e+00 : f32
      %19 = vector.broadcast %cst_17 : f32 to vector<2x4xf32>
      %20 = arith.cmpf oge, %18, %19 : vector<2x4xf32>
      %cst_18 = arith.constant 1.000000e-01 : f32
      %21 = vector.broadcast %cst_18 : f32 to vector<2x4xf32>
      %22 = arith.mulf %21, %18 : vector<2x4xf32>
      %23 = arith.select %20, %18, %22 : vector<2x4xi1>, vector<2x4xf32>
      %c0_19 = arith.constant 0 : index
      %c0_20 = arith.constant 0 : index
      %24 = vector.load %arg5[%c0_19, %c0_20] : memref<4x2xf32, #tpu.memory_space<vmem>>, vector<4x2xf32>
      %cst_21 = arith.constant dense<0.000000e+00> : vector<2x2xf32>
      %25 = tpu.matmul %23, %24, %cst_21 {dimension_numbers = #tpu.dot_dimension_numbers<[1], [0], [0], [1], [0, 0, 1, 1], [], []>} : vector<2x4xf32>, vector<4x2xf32>, vector<2x2xf32> -> vector<2x2xf32>
      %c0_22 = arith.constant 0 : index
      %c0_23 = arith.constant 0 : index
      %26 = vector.load %arg6[%c0_22, %c0_23] : memref<1x2xf32, #tpu.memory_space<vmem>>, vector<1x2xf32>
      %27 = vector.broadcast %26 : vector<1x2xf32> to vector<2x2xf32>
      %28 = arith.addf %25, %27 : vector<2x2xf32>
      %cst_24 = arith.constant 0.000000e+00 : f32
      %29 = vector.broadcast %cst_24 : f32 to vector<2x2xf32>
      %30 = arith.cmpf oge, %28, %29 : vector<2x2xf32>
      %cst_25 = arith.constant 1.000000e-01 : f32
      %31 = vector.broadcast %cst_25 : f32 to vector<2x2xf32>
      %32 = arith.mulf %31, %28 : vector<2x2xf32>
      %33 = arith.select %30, %28, %32 : vector<2x2xi1>, vector<2x2xf32>
      %c0_26 = arith.constant 0 : index
      %c0_27 = arith.constant 0 : index
      %34 = vector.load %arg7[%c0_26, %c0_27] : memref<2x4xf32, #tpu.memory_space<vmem>>, vector<2x4xf32>
      %cst_28 = arith.constant dense<0.000000e+00> : vector<2x4xf32>
      %35 = tpu.matmul %33, %34, %cst_28 {dimension_numbers = #tpu.dot_dimension_numbers<[1], [0], [0], [1], [0, 0, 1, 1], [], []>} : vector<2x2xf32>, vector<2x4xf32>, vector<2x4xf32> -> vector<2x4xf32>
      %c0_29 = arith.constant 0 : index
      %c0_30 = arith.constant 0 : index
      %36 = vector.load %arg8[%c0_29, %c0_30] : memref<1x4xf32, #tpu.memory_space<vmem>>, vector<1x4xf32>
      %37 = vector.broadcast %36 : vector<1x4xf32> to vector<2x4xf32>
      %38 = arith.addf %35, %37 : vector<2x4xf32>
      %39 = arith.negf %38 : vector<2x4xf32>
      %40 = math.exp %39 : vector<2x4xf32>
      %cst_31 = arith.constant 1.000000e+00 : f32
      %41 = vector.broadcast %cst_31 : f32 to vector<2x4xf32>
      %42 = arith.addf %41, %40 : vector<2x4xf32>
      %43 = arith.divf %41, %42 : vector<2x4xf32>
      %c0_32 = arith.constant 0 : index
      %c0_33 = arith.constant 0 : index
      %c0_34 = arith.constant 0 : index
      %44 = vector.load %arg9[%c0_32, %c0_33, %c0_34] : memref<2x1x4xf32, #tpu.memory_space<vmem>>, vector<2x1x4xf32>
      %45 = vector.shape_cast %44 : vector<2x1x4xf32> to vector<2x4xf32>
      %46 = vector.shape_cast %43 : vector<2x4xf32> to vector<2x1x4xf32>
      tpu.vector_store %arg9[%c0_32, %c0_33, %c0_34], %46 {strides = array<i32>} : memref<2x1x4xf32, #tpu.memory_space<vmem>>, vector<2x1x4xf32>,
    } else {
    }
    return
  }
  func.func @transform_0(%arg0: i32, %arg1: i32) -> (i32, i32, i32) {
    %c0_i32 = arith.constant 0 : i32
    %c0_i32_0 = arith.constant 0 : i32
    return %arg0, %c0_i32, %arg1 : i32, i32, i32
  }
  func.func @transform_1(%arg0: i32, %arg1: i32) -> (i32, i32) {
    %c0_i32 = arith.constant 0 : i32
    %c0_i32_0 = arith.constant 0 : i32
    %c0_i32_1 = arith.constant 0 : i32
    return %c0_i32, %c0_i32_0 : i32, i32
  }
  func.func @transform_2(%arg0: i32, %arg1: i32) -> (i32, i32) {
    %c0_i32 = arith.constant 0 : i32
    %c0_i32_0 = arith.constant 0 : i32
    %c0_i32_1 = arith.constant 0 : i32
    return %c0_i32, %c0_i32_0 : i32, i32
  }
  func.func @transform_3(%arg0: i32, %arg1: i32) -> (i32, i32) {
    %c0_i32 = arith.constant 0 : i32
    %c0_i32_0 = arith.constant 0 : i32
    %c0_i32_1 = arith.constant 0 : i32
    return %c0_i32, %c0_i32_0 : i32, i32
  }
  func.func @transform_4(%arg0: i32, %arg1: i32) -> (i32, i32) {
    %c0_i32 = arith.constant 0 : i32
    %c0_i32_0 = arith.constant 0 : i32
    %c0_i32_1 = arith.constant 0 : i32
    return %c0_i32, %c0_i32_0 : i32, i32
  }
  func.func @transform_5(%arg0: i32, %arg1: i32) -> (i32, i32) {
    %c0_i32 = arith.constant 0 : i32
    %c0_i32_0 = arith.constant 0 : i32
    %c0_i32_1 = arith.constant 0 : i32
    return %c0_i32, %c0_i32_0 : i32, i32
  }
  func.func @transform_6(%arg0: i32, %arg1: i32) -> (i32, i32) {
    %c0_i32 = arith.constant 0 : i32
    %c0_i32_0 = arith.constant 0 : i32
    %c0_i32_1 = arith.constant 0 : i32
    return %c0_i32, %c0_i32_0 : i32, i32
  }
  func.func @transform_7(%arg0: i32, %arg1: i32) -> (i32, i32, i32) {
    %c0_i32 = arith.constant 0 : i32
    %c0_i32_0 = arith.constant 0 : i32
    %c0_i32_1 = arith.constant 0 : i32
    return %arg0, %c0_i32, %c0_i32_0 : i32, i32, i32
  }
}

</mosaic_0001>

<llo_original>
// kernel: tpu_custom_call.1
$region0: #{tpu_custom_call.1}
  #allocation0 [shape = 'u32[]', space=smem, size = 0x4, offset = 0x4, fixed_abs, tag = 'smem constant byte address 0x4 - core index']
  #allocation1 [shape = 'u32[144,128]{1,0:T(1,128)}', space=vmem, size = 0x12000, scoped, tag = 'internal scratch']
  #allocation2 [shape = 'f32[2,4]{1,0:T(2,128)}', space=vmem, size = 0x400, scoped, tag = 'scratch operand']
  %s0 = inlined_call_operand.hbm [shape: f32[2,4,256], index: 0, kind: input, shape index: {}]
  %s1 = inlined_call_operand.vmem [shape: f32[4,4], index: 1, kind: input, shape index: {}]
  %s2 = inlined_call_operand.vmem [shape: f32[1,4], index: 2, kind: input, shape index: {}]
  %s3 = inlined_call_operand.vmem [shape: f32[4,2], index: 3, kind: input, shape index: {}]
  %s4 = inlined_call_operand.vmem [shape: f32[1,2], index: 4, kind: input, shape index: {}]
  %s5 = inlined_call_operand.vmem [shape: f32[2,4], index: 5, kind: input, shape index: {}]
  %s6 = inlined_call_operand.vmem [shape: f32[1,4], index: 6, kind: input, shape index: {}]
  %s7 = inlined_call_operand.hbm [shape: f32[2,1,4], index: 7, kind: output, shape index: {}]
  %s8 = sld [smem:[#allocation0]]
  $region50: #{tpu_custom_call.1} parent=0
    _
  %s10 = ssub.s32 1, %s8
  %s11 = scalar_select 0, %s10, %s8
  $region1: #{tpu_custom_call.1} parent=0
    #allocation3 [shape = 'u8[8192]{0}', space=vmem, size = 0x2000, scoped, tag = 'input window, operand 0, single buffered']
    #allocation4 [shape = 's32[1]{0}', space=sflag, size = 0x4, scoped, tag = 'scoped memory for tpu_custom_call.1']
    #allocation5 [shape = 's32[1]{0}', space=sflag, size = 0x4, scoped, tag = 'scoped memory for tpu_custom_call.1']
    #allocation6 [shape = 'u8[1024]{0}', space=vmem, size = 0x400, scoped, tag = 'output window, operand 0, single buffered']
    %12 = vsyncpa [#allocation4], 0
    %13 = vsyncpa [#allocation5], 0
    // Predicated region
    $region2: #{tpu_custom_call.1} parent=1 // pred_check
      _
    $region3: #{tpu_custom_call.1} parent=1 // pred_check_branch
      %15 = sbr.rel (0) target = $region5
    $region4: #{tpu_custom_call.1} parent=1 // pred_region
      %s17 = ssub.s32 256, 256
      %18 = vsyncadd [#allocation4], %s17
      %s19 = sshll.u32 [#allocation3], 4
      %s20 = int_to_ptr.vmem [resolvable:$true] %s19
      %25 = dma.hbm_to_vmem [thread:$0]  %s0, 256, %s20, [#allocation4], 128, 128, 8
    $region5: #{tpu_custom_call.1} parent=1 // pred_fallthru
      _
    // Predicated region
    $region6: #{tpu_custom_call.1} parent=1 // pred_check
      _
    $region7: #{tpu_custom_call.1} parent=1 // pred_check_branch
      %27 = sbr.rel (0) target = $region9
    $region8: #{tpu_custom_call.1} parent=1 // pred_region
      _
    $region9: #{tpu_custom_call.1} parent=1 // pred_fallthru
      _
    // Predicated region
    $region10: #{tpu_custom_call.1} parent=1 // pred_check
      _
    $region11: #{tpu_custom_call.1} parent=1 // pred_check_branch
      %29 = sbr.rel (0) target = $region13
    $region12: #{tpu_custom_call.1} parent=1 // pred_region
      _
    $region13: #{tpu_custom_call.1} parent=1 // pred_fallthru
      _
    // Predicated region
    $region14: #{tpu_custom_call.1} parent=1 // pred_check
      _
    $region15: #{tpu_custom_call.1} parent=1 // pred_check_branch
      %31 = sbr.rel (0) target = $region17
    $region16: #{tpu_custom_call.1} parent=1 // pred_region
      _
    $region17: #{tpu_custom_call.1} parent=1 // pred_fallthru
      _
    // Predicated region
    $region18: #{tpu_custom_call.1} parent=1 // pred_check
      _
    $region19: #{tpu_custom_call.1} parent=1 // pred_check_branch
      %33 = sbr.rel (0) target = $region21
    $region20: #{tpu_custom_call.1} parent=1 // pred_region
      _
    $region21: #{tpu_custom_call.1} parent=1 // pred_fallthru
      _
    // Predicated region
    $region22: #{tpu_custom_call.1} parent=1 // pred_check
      _
    $region23: #{tpu_custom_call.1} parent=1 // pred_check_branch
      %35 = sbr.rel (0) target = $region25
    $region24: #{tpu_custom_call.1} parent=1 // pred_region
      _
    $region25: #{tpu_custom_call.1} parent=1 // pred_fallthru
      _
    // Predicated region
    $region26: #{tpu_custom_call.1} parent=1 // pred_check
      _
    $region27: #{tpu_custom_call.1} parent=1 // pred_check_branch
      %37 = sbr.rel (0) target = $region29
    $region28: #{tpu_custom_call.1} parent=1 // pred_region
      _
    $region29: #{tpu_custom_call.1} parent=1 // pred_fallthru
      _
    // Predicated region
    $region30: #{tpu_custom_call.1} parent=1 // pred_check
      _
    $region31: #{tpu_custom_call.1} parent=1 // pred_check_branch
      %39 = sbr.rel (0) target = $region33
    $region32: #{tpu_custom_call.1} parent=1 // pred_region
      %40 = dma.done [#allocation4], 256
    $region33: #{tpu_custom_call.1} parent=1 // pred_fallthru
      _
    %p41 = scmp.eq.s32.totalorder 0, 0
    // Predicated region
    $region34: #{tpu_custom_call.1} parent=1 // pred_check
      %p42 = pneg %p41
    $region35: #{tpu_custom_call.1} parent=1 // pred_check_branch
      %44 = sbr.rel (%p42) target = $region37
    $region36: #{tpu_custom_call.1} parent=1 // pred_region
      %vm45 = vcmask 25600
      %46 = vst.msk [vmem:[#allocation2] sm:$0x3] %vm45, 0.0
    $region37: #{tpu_custom_call.1} parent=1 // pred_fallthru
      _
    %v47 = vld [vmem:[#allocation3] sm:$0xff]
    %v48 = vld [vmem:[#allocation3 + $0x8] sm:$0xff]
    %v49 = vld [vmem:[#allocation2] sm:$0x3]
    %v52 = vcombine.high %v47, %v47
    %v53 = vcombine.high %v48, %v48
    %vm56 = vcmask 1043456
    %v57 = vsel %vm56, %v47, 0.0
    %v58 = vsel %vm56, %v52, 0.0
    %v59 = vadd.f32 %v57, %v58
    %60 = vadd.xlane.f32.xlu0 %v59
    %v61 = vpop.xlane.xlu0 %60
    %v62 = vsel %vm56, %v48, 0.0
    %v63 = vsel %vm56, %v53, 0.0
    %v64 = vadd.f32 %v62, %v63
    %65 = vadd.xlane.f32.xlu0 %v64
    %v66 = vpop.xlane.xlu0 %65
    %v69 = vlaneseq
    %v70 = vand.u32 %v69, 127
    %v71 = vlaneseq
    %v72 = vshrl.u32 %v71, 7
    %v73 = vsub.s32 %v70, %v72
    %v74 = vrot.slane %v61, %v73
    %v75 = vlaneseq
    %v76 = vshrl.u32 %v75, 7
    %v77 = vsub.s32 %v70, %v76
    %v78 = vrot.slane %v66, %v77
    %vm79 = vcmask 1041409
    %v80 = vsel %vm79, %v78, %v74
    %v82 = vadd.f32 %v49, %v80
    %vm83 = vcmask 25600
    %84 = vst.msk [vmem:[#allocation2] sm:$0x3] %vm83, %v82
    // Predicated region
    $region38: #{tpu_custom_call.1} parent=1 // pred_check
      %p85 = pneg %p41
    $region39: #{tpu_custom_call.1} parent=1 // pred_check_branch
      %87 = sbr.rel (%p85) target = $region41
    $region40: #{tpu_custom_call.1} parent=1 // pred_region
      %v88 = vld [vmem:[#allocation2] sm:$0x3]
      %v89 = vmul.f32 %v88, 0.00390625
      %v90 = vld [vmem:[%s1] sm:$0xf]
      %v91 = vld [vmem:[%s2] sm:$0x1]
      %v93 = vlaneseq
      %v94 = vshrl.u32 %v93, 7
      %v95 = vsub.s32 0, %v94
      %v96 = vrot.slane %v91, %v95
      %vm98 = vcmask 31744
      %v100 = vsel %vm98, %v89, 0
      %v103 = vsel %vm56, %v90, 0
      %105 = vmatprep.subr.mxu0 0.0
      %106 = vmatpush1.msra.mxu0 %v103
      %107 = vmatprep.subr.mxu0 0.0
      %108 = vmatpush1.msra.mxu0 0.0
      %109 = vmatprep.subr.mxu0 0.0
      %110 = vmatpush1.msra.mxu0 0.0
      %111 = vmatprep.subr.mxu0 0.0
      %112 = vmatpush1.msra.mxu0 0.0
      %113 = vmatprep.subr.mxu0 0.0
      %114 = vmatpush1.msra.mxu0 0.0
      %115 = vmatprep.subr.mxu0 0.0
      %116 = vmatpush1.msra.mxu0 0.0
      %117 = vmatprep.subr.mxu0 0.0
      %118 = vmatpush1.msra.mxu0 0.0
      %119 = vmatprep.subr.mxu0 0.0
      %120 = vmatpush1.msra.mxu0 0.0
      %121 = vmatprep.subr.mxu0 0.0
      %122 = vmatpush1.msra.mxu0 0.0
      %123 = vmatprep.subr.mxu0 0.0
      %124 = vmatpush1.msra.mxu0 0.0
      %125 = vmatprep.subr.mxu0 0.0
      %126 = vmatpush1.msra.mxu0 0.0
      %127 = vmatprep.subr.mxu0 0.0
      %128 = vmatpush1.msra.mxu0 0.0
      %129 = vmatprep.subr.mxu0 0.0
      %130 = vmatpush1.msra.mxu0 0.0
      %131 = vmatprep.subr.mxu0 0.0
      %132 = vmatpush1.msra.mxu0 0.0
      %133 = vmatprep.subr.mxu0 0.0
      %134 = vmatpush1.msra.mxu0 0.0
      %135 = vmatprep.subr.mxu0 0.0
      %136 = vmatpush1.msra.mxu0 0.0
      %137 = vmatprep.subr.mxu0 0.0
      %138 = vmatpush1.msra.mxu0 0.0
      %139 = vmatprep.subr.mxu0 0.0
      %140 = vmatpush1.msra.mxu0 0.0
      %141 = vmatprep.subr.mxu0 0.0
      %142 = vmatpush1.msra.mxu0 0.0
      %143 = vmatprep.subr.mxu0 0.0
      %144 = vmatpush1.msra.mxu0 0.0
      %145 = vmatprep.subr.mxu0 0.0
      %146 = vmatpush1.msra.mxu0 0.0
      %147 = vmatprep.subr.mxu0 0.0
      %148 = vmatpush1.msra.mxu0 0.0
      %149 = vmatprep.subr.mxu0 0.0
      %150 = vmatpush1.msra.mxu0 0.0
      %151 = vmatprep.subr.mxu0 0.0
      %152 = vmatpush1.msra.mxu0 0.0
      %153 = vmatprep.subr.mxu0 0.0
      %154 = vmatpush1.msra.mxu0 0.0
      %155 = vmatprep.subr.mxu0 0.0
      %156 = vmatpush1.msra.mxu0 0.0
      %157 = vmatprep.subr.mxu0 0.0
      %158 = vmatpush1.msra.mxu0 0.0
      %159 = vmatprep.subr.mxu0 0.0
      %160 = vmatpush1.msra.mxu0 0.0
      %161 = vmatprep.subr.mxu0 0.0
      %162 = vmatpush1.msra.mxu0 0.0
      %163 = vmatprep.subr.mxu0 0.0
      %164 = vmatpush1.msra.mxu0 0.0
      %165 = vmatprep.subr.mxu0 0.0
      %166 = vmatpush1.msra.mxu0 0.0
      %167 = vmatprep.subr.mxu0 0.0
      %168 = vmatpush1.msra.mxu0 0.0
      %169 = vmatprep.mubr.f32.mxu0 0.0
      %170 = vmatmul.mubr.f32.gmra.mrb[0].mxu0 %v100
      %v171 = vpop.f32.mrb[0].mxu0
      %v172 = vadd.f32 %v96, %v171
      %v173 = vpop.f32.mrb[0].mxu0
      %174 = vdwg.mxu0
      %vm175 = vcmp.ge.f32.partialorder %v172, 0.0
      %v176 = vmul.f32 %v172, 0.1
      %v177 = vsel %vm175, %v172, %v176
      %v178 = vld [vmem:[%s3] sm:$0xf]
      %v179 = vld [vmem:[%s4] sm:$0x1]
      %v181 = vlaneseq
      %v182 = vshrl.u32 %v181, 7
      %v183 = vsub.s32 0, %v182
      %v184 = vrot.slane %v179, %v183
      %v187 = vsel %vm98, %v177, 0
      %v190 = vsel %vm56, %v178, 0
      %192 = vmatprep.subr.mxu0 0.0
      %193 = vmatpush1.msra.mxu0 %v190
      %194 = vmatprep.subr.mxu0 0.0
      %195 = vmatpush1.msra.mxu0 0.0
      %196 = vmatprep.subr.mxu0 0.0
      %197 = vmatpush1.msra.mxu0 0.0
      %198 = vmatprep.subr.mxu0 0.0
      %199 = vmatpush1.msra.mxu0 0.0
      %200 = vmatprep.subr.mxu0 0.0
      %201 = vmatpush1.msra.mxu0 0.0
      %202 = vmatprep.subr.mxu0 0.0
      %203 = vmatpush1.msra.mxu0 0.0
      %204 = vmatprep.subr.mxu0 0.0
      %205 = vmatpush1.msra.mxu0 0.0
      %206 = vmatprep.subr.mxu0 0.0
      %207 = vmatpush1.msra.mxu0 0.0
      %208 = vmatprep.subr.mxu0 0.0
      %209 = vmatpush1.msra.mxu0 0.0
      %210 = vmatprep.subr.mxu0 0.0
      %211 = vmatpush1.msra.mxu0 0.0
      %212 = vmatprep.subr.mxu0 0.0
      %213 = vmatpush1.msra.mxu0 0.0
      %214 = vmatprep.subr.mxu0 0.0
      %215 = vmatpush1.msra.mxu0 0.0
      %216 = vmatprep.subr.mxu0 0.0
      %217 = vmatpush1.msra.mxu0 0.0
      %218 = vmatprep.subr.mxu0 0.0
      %219 = vmatpush1.msra.mxu0 0.0
      %220 = vmatprep.subr.mxu0 0.0
      %221 = vmatpush1.msra.mxu0 0.0
      %222 = vmatprep.subr.mxu0 0.0
      %223 = vmatpush1.msra.mxu0 0.0
      %224 = vmatprep.subr.mxu0 0.0
      %225 = vmatpush1.msra.mxu0 0.0
      %226 = vmatprep.subr.mxu0 0.0
      %227 = vmatpush1.msra.mxu0 0.0
      %228 = vmatprep.subr.mxu0 0.0
      %229 = vmatpush1.msra.mxu0 0.0
      %230 = vmatprep.subr.mxu0 0.0
      %231 = vmatpush1.msra.mxu0 0.0
      %232 = vmatprep.subr.mxu0 0.0
      %233 = vmatpush1.msra.mxu0 0.0
      %234 = vmatprep.subr.mxu0 0.0
      %235 = vmatpush1.msra.mxu0 0.0
      %236 = vmatprep.subr.mxu0 0.0
      %237 = vmatpush1.msra.mxu0 0.0
      %238 = vmatprep.subr.mxu0 0.0
      %239 = vmatpush1.msra.mxu0 0.0
      %240 = vmatprep.subr.mxu0 0.0
      %241 = vmatpush1.msra.mxu0 0.0
      %242 = vmatprep.subr.mxu0 0.0
      %243 = vmatpush1.msra.mxu0 0.0
      %244 = vmatprep.subr.mxu0 0.0
      %245 = vmatpush1.msra.mxu0 0.0
      %246 = vmatprep.subr.mxu0 0.0
      %247 = vmatpush1.msra.mxu0 0.0
      %248 = vmatprep.subr.mxu0 0.0
      %249 = vmatpush1.msra.mxu0 0.0
      %250 = vmatprep.subr.mxu0 0.0
      %251 = vmatpush1.msra.mxu0 0.0
      %252 = vmatprep.subr.mxu0 0.0
      %253 = vmatpush1.msra.mxu0 0.0
      %254 = vmatprep.subr.mxu0 0.0
      %255 = vmatpush1.msra.mxu0 0.0
      %256 = vmatprep.mubr.f32.mxu0 0.0
      %257 = vmatmul.mubr.f32.gmra.mrb[0].mxu0 %v187
      %v258 = vpop.f32.mrb[0].mxu0
      %v259 = vadd.f32 %v184, %v258
      %v260 = vpop.f32.mrb[0].mxu0
      %261 = vdwg.mxu0
      %vm262 = vcmp.ge.f32.partialorder %v259, 0.0
      %v263 = vmul.f32 %v259, 0.1
      %v264 = vsel %vm262, %v259, %v263
      %v265 = vld [vmem:[%s5] sm:$0x3]
      %v266 = vld [vmem:[%s6] sm:$0x1]
      %v268 = vlaneseq
      %v269 = vshrl.u32 %v268, 7
      %v270 = vsub.s32 0, %v269
      %v271 = vrot.slane %v266, %v270
      %vm273 = vcmask 15360
      %v275 = vsel %vm273, %v264, 0
      %vm277 = vcmask 1041408
      %v279 = vsel %vm277, %v265, 0
      %281 = vmatprep.subr.mxu0 0.0
      %282 = vmatpush1.msra.mxu0 %v279
      %283 = vmatprep.subr.mxu0 0.0
      %284 = vmatpush1.msra.mxu0 0.0
      %285 = vmatprep.subr.mxu0 0.0
      %286 = vmatpush1.msra.mxu0 0.0
      %287 = vmatprep.subr.mxu0 0.0
      %288 = vmatpush1.msra.mxu0 0.0
      %289 = vmatprep.subr.mxu0 0.0
      %290 = vmatpush1.msra.mxu0 0.0
      %291 = vmatprep.subr.mxu0 0.0
      %292 = vmatpush1.msra.mxu0 0.0
      %293 = vmatprep.subr.mxu0 0.0
      %294 = vmatpush1.msra.mxu0 0.0
      %295 = vmatprep.subr.mxu0 0.0
      %296 = vmatpush1.msra.mxu0 0.0
      %297 = vmatprep.subr.mxu0 0.0
      %298 = vmatpush1.msra.mxu0 0.0
      %299 = vmatprep.subr.mxu0 0.0
      %300 = vmatpush1.msra.mxu0 0.0
      %301 = vmatprep.subr.mxu0 0.0
      %302 = vmatpush1.msra.mxu0 0.0
      %303 = vmatprep.subr.mxu0 0.0
      %304 = vmatpush1.msra.mxu0 0.0
      %305 = vmatprep.subr.mxu0 0.0
      %306 = vmatpush1.msra.mxu0 0.0
      %307 = vmatprep.subr.mxu0 0.0
      %308 = vmatpush1.msra.mxu0 0.0
      %309 = vmatprep.subr.mxu0 0.0
      %310 = vmatpush1.msra.mxu0 0.0
      %311 = vmatprep.subr.mxu0 0.0
      %312 = vmatpush1.msra.mxu0 0.0
      %313 = vmatprep.subr.mxu0 0.0
      %314 = vmatpush1.msra.mxu0 0.0
      %315 = vmatprep.subr.mxu0 0.0
      %316 = vmatpush1.msra.mxu0 0.0
      %317 = vmatprep.subr.mxu0 0.0
      %318 = vmatpush1.msra.mxu0 0.0
      %319 = vmatprep.subr.mxu0 0.0
      %320 = vmatpush1.msra.mxu0 0.0
      %321 = vmatprep.subr.mxu0 0.0
      %322 = vmatpush1.msra.mxu0 0.0
      %323 = vmatprep.subr.mxu0 0.0
      %324 = vmatpush1.msra.mxu0 0.0
      %325 = vmatprep.subr.mxu0 0.0
      %326 = vmatpush1.msra.mxu0 0.0
      %327 = vmatprep.subr.mxu0 0.0
      %328 = vmatpush1.msra.mxu0 0.0
      %329 = vmatprep.subr.mxu0 0.0
      %330 = vmatpush1.msra.mxu0 0.0
      %331 = vmatprep.subr.mxu0 0.0
      %332 = vmatpush1.msra.mxu0 0.0
      %333 = vmatprep.subr.mxu0 0.0
      %334 = vmatpush1.msra.mxu0 0.0
      %335 = vmatprep.subr.mxu0 0.0
      %336 = vmatpush1.msra.mxu0 0.0
      %337 = vmatprep.subr.mxu0 0.0
      %338 = vmatpush1.msra.mxu0 0.0
      %339 = vmatprep.subr.mxu0 0.0
      %340 = vmatpush1.msra.mxu0 0.0
      %341 = vmatprep.subr.mxu0 0.0
      %342 = vmatpush1.msra.mxu0 0.0
      %343 = vmatprep.subr.mxu0 0.0
      %344 = vmatpush1.msra.mxu0 0.0
      %345 = vmatprep.mubr.f32.mxu0 0.0
      %346 = vmatmul.mubr.f32.gmra.mrb[0].mxu0 %v275
      %v347 = vpop.f32.mrb[0].mxu0
      %v348 = vadd.f32 %v271, %v347
      %v349 = vpop.f32.mrb[0].mxu0
      %350 = vdwg.mxu0
      %v351 = vxor.u32 %v348, 2147483648
      %v352 = vmul.f32 %v351, 1.442695
      %v353 = vpow.pop %v352
      %v354 = vadd.f32 %v353, 1.0
      %v355 = vrcp.pop %v354
      %v356 = vmul.f32 1.0, %v355
      %v359 = vunpack.c.l.s4 1966171168
      %v360 = vunpack.c.0.s8 %v359
      %v361 = vlaneseq
      %v362 = vshrl.u32 %v361, 7
      %v363 = vsub.s32 %v360, %v362
      %v364 = vrot.slane %v356, %v363
      %v365 = vcombine.high %v364, %v364
      %v367 = vunpack.c.l.s4 1966171168
      %v368 = vunpack.c.0.s8 %v367
      %v369 = vlaneseq
      %v370 = vshrl.u32 %v369, 7
      %v371 = vsub.s32 %v368, %v370
      %v372 = vrot.slane %v364, %v371
      %v374 = vunpack.c.l.s4 1966171168
      %v375 = vunpack.c.0.s8 %v374
      %v376 = vlaneseq
      %v377 = vshrl.u32 %v376, 7
      %v378 = vsub.s32 %v375, %v377
      %v379 = vrot.slane %v365, %v378
      %vm382 = vcmask 24576
      %383 = vst.msk [vmem:[#allocation6] sm:$0x1] %vm382, %v372
      %384 = vst.msk [vmem:[#allocation6 + $0x1] sm:$0x1] %vm382, %v379
    $region41: #{tpu_custom_call.1} parent=1 // pred_fallthru
      _
    // Predicated region
    $region42: #{tpu_custom_call.1} parent=1 // pred_check
      _
    $region43: #{tpu_custom_call.1} parent=1 // pred_check_branch
      %386 = sbr.rel (0) target = $region45
    $region44: #{tpu_custom_call.1} parent=1 // pred_region
      %s388 = ssub.s32 32, 32
      %389 = vsyncadd [#allocation5], %s388
      %s390 = sshll.u32 [#allocation6], 4
      %s391 = int_to_ptr.vmem [resolvable:$true] %s390
      %396 = dma.vmem_to_hbm [thread:$0]  %s391, 32, %s7, [#allocation5], 16, 16, 1
    $region45: #{tpu_custom_call.1} parent=1 // pred_fallthru
      _
    // Predicated region
    $region46: #{tpu_custom_call.1} parent=1 // pred_check
      _
    $region47: #{tpu_custom_call.1} parent=1 // pred_check_branch
      %398 = sbr.rel (0) target = $region49
    $region48: #{tpu_custom_call.1} parent=1 // pred_region
      %399 = dma.done [#allocation5], 32
    $region49: #{tpu_custom_call.1} parent=1 // pred_fallthru
      _
    %400 = vsyncpa [#allocation4], 1
    %401 = vsyncpa [#allocation5], 1

</llo_original>
